<compile_context>
chip_gen: v7x
topology: tpu7x:2x2x1
jax: 0.10.0
libtpu: 0.0.40
codegen_flags: <defaults>
</compile_context>

<pallas_src>
import math

import jax
import jax.numpy as jnp
from jax.experimental import pallas as pl
from jax.experimental.pallas import tpu as pltpu

LRELU_SLOPE = 0.01          # torch.nn.LeakyReLU default negative_slope
ACTOR_EPS = 1e-4            # actor_eps default
SOFTPLUS_THRESHOLD = 20.0   # torch.nn.Softplus default threshold
K_INIT = 10.0               # actor_k_init default
LANE = 128                  # TPU lane width
MAX_BATCH_TILE = 256        # keeps per-tile VMEM use tiny even on v7x (64 MiB)


def _round_up(x, m):
    return ((x + m - 1) // m) * m


# ----------------------------- activation helpers -----------------------------

def _lrelu(x):
    return jnp.where(x > 0, x, LRELU_SLOPE * x)


def _lrelu_grad(x):
    return jnp.where(x > 0, jnp.float32(1.0), jnp.float32(LRELU_SLOPE))


def _softplus(x):
    # matches torch.nn.Softplus(beta=1, threshold=20)
    safe = jnp.minimum(x, SOFTPLUS_THRESHOLD)
    return jnp.where(x > SOFTPLUS_THRESHOLD, x, jnp.log1p(jnp.exp(safe)))


# ------------------------------- Pallas kernels -------------------------------

def _make_actor_kernel(tb, d, h1f, h2f, a, h1k, h2k, out_w):
    """LipsNet actor: f_net + k_net + analytic per-sample Jacobian Frobenius norm.

    Packed bias matrix rows (each zero-padded to the bias width):
      0: fused first-layer bias [f_b1 | k_b1]
      1: f_b2      2: f_b3 (padded to out_w)
      3: k_b2      4: k_b3 (scalar)
      5: k_w3^T    (the 1-wide k head weight, used as a VPU/XLU dot)
    """

    def kernel(x_ref, w1f_ref, fw2_ref, fw3p_ref, kw2_ref,
               fw1t_ref, fw2t_ref, fw3t_ref, b_ref, out_ref):
        x = x_ref[...]                                                  # (TB, D)

        # Fused first layer: one lane-full (TB,D)@(D,H1f+H1k) matmul feeds both nets.
        z1 = jnp.dot(x, w1f_ref[...],
                     preferred_element_type=jnp.float32) + b_ref[0:1, :h1f + h1k]
        z1f = z1[:, :h1f]
        z1k = z1[:, h1f:h1f + h1k]

        # ---- f_net forward (LeakyReLU hidden, identity output) ----
        h1 = _lrelu(z1f)
        d1 = _lrelu_grad(z1f)                                           # (TB, H1F)
        z2 = jnp.dot(h1, fw2_ref[...],
                     preferred_element_type=jnp.float32) + b_ref[1:2, :h2f]
        h2 = _lrelu(z2)
        d2 = _lrelu_grad(z2)                                            # (TB, H2F)
        # fw3p is zero-padded host-side to out_w columns: lanes [0:A] hold f_out,
        # the remaining lanes are exactly zero (bias row zero-padded too).
        f_full = jnp.dot(h2, fw3p_ref[...],
                         preferred_element_type=jnp.float32) + b_ref[2:3, :out_w]

        # ---- per-sample Jacobian of f_net, propagated from the output side ----
        #   J_b = W3^T diag(d2_b) W2^T diag(d1_b) W1^T          shape (A, D)
        # flattened to 2-D MXU matmuls over (TB*A, H) rows.
        g2 = fw3t_ref[...][None, :, :] * d2[:, None, :]                 # (TB, A, H2F)
        g1 = jnp.dot(g2.reshape(tb * a, h2f), fw2t_ref[...],
                     preferred_element_type=jnp.float32)                # (TB*A, H1F)
        g1 = g1.reshape(tb, a, h1f) * d1[:, None, :]
        jac = jnp.dot(g1.reshape(tb * a, h1f), fw1t_ref[...],
                      preferred_element_type=jnp.float32)               # (TB*A, D)
        jac = jac.reshape(tb, a, d)
        jac_norm = jnp.sqrt(jnp.sum(jnp.sum(jac * jac, axis=2),
                                    axis=1, keepdims=True))             # (TB, 1)

        # ---- k_net forward (tanh hidden, softplus output) ----
        k1 = jnp.tanh(z1k)
        k2 = jnp.tanh(jnp.dot(k1, kw2_ref[...],
                              preferred_element_type=jnp.float32) + b_ref[3:4, :h2k])
        # 1-wide head: VPU mul + XLU lane-reduce (co-issues with the MXU work above).
        k_lin = jnp.sum(k2 * b_ref[5:6, :h2k], axis=-1, keepdims=True) + b_ref[4:5, :1]
        k_out = _softplus(k_lin)                                        # (TB, 1)

        # ---- LipsNet combination (squash_action=False): k * f / (||J||_F + eps) ----
        # reciprocal on the EUP slot; packed lane-dense output:
        #   lanes [0:A] action mean, lane A k_out, lane A+1 jac_norm, rest zero.
        scale = k_out * pl.reciprocal(jac_norm + ACTOR_EPS, approx=True)  # (TB, 1)
        lane = jax.lax.broadcasted_iota(jnp.int32, (tb, out_w), 1)
        packed = f_full * scale
        packed = jnp.where(lane == a, k_out, packed)
        packed = jnp.where(lane == a + 1, jac_norm, packed)
        out_ref[...] = packed

    return kernel


def _make_critic_kernel(h1, h2, h3):
    """Critic MLP: obs -> [h1, h2, h3] (LeakyReLU) -> 1 (value in lane 0)."""

    def kernel(x_ref, w1_ref, w2_ref, w3_ref, w4p_ref, b_ref, out_ref):
        h = _lrelu(jnp.dot(x_ref[...], w1_ref[...],
                           preferred_element_type=jnp.float32) + b_ref[0:1, :h1])
        h = _lrelu(jnp.dot(h, w2_ref[...],
                           preferred_element_type=jnp.float32) + b_ref[1:2, :h2])
        h = _lrelu(jnp.dot(h, w3_ref[...],
                           preferred_element_type=jnp.float32) + b_ref[2:3, :h3])
        # w4 is zero-padded host-side to LANE columns -> lane-dense unmasked store.
        out_ref[...] = jnp.dot(h, w4p_ref[...],
                               preferred_element_type=jnp.float32) + b_ref[3:4, :LANE]

    return kernel


# ------------------------------ host-side wrappers ----------------------------

def _const_spec(arr):
    # Full-array block with a constant index_map: stays VMEM-resident across
    # all batch-grid steps (weights / packed biases).
    return pl.BlockSpec(arr.shape, lambda i: (0, 0))


def _batch_tiling(batch):
    tb = min(MAX_BATCH_TILE, _round_up(batch, 8))
    b_pad = _round_up(batch, tb)
    return tb, b_pad


def lipsnet_actor_forward(obs, packed):
    (w1f, fw2, fw3p, kw2, fw1t, fw2t, fw3t, bmat, dims) = packed
    d, h1f, h2f, a, h1k, h2k = dims
    out_w = LANE
    batch = obs.shape[0]
    tb, b_pad = _batch_tiling(batch)
    obs = obs.astype(jnp.float32)
    if b_pad != batch:
        obs = jnp.pad(obs, ((0, b_pad - batch), (0, 0)))

    kernel = _make_actor_kernel(tb, d, h1f, h2f, a, h1k, h2k, out_w)
    out = pl.pallas_call(
        kernel,
        out_shape=jax.ShapeDtypeStruct((b_pad, out_w), jnp.float32),
        grid_spec=pltpu.PrefetchScalarGridSpec(
            num_scalar_prefetch=0,
            grid=(b_pad // tb,),
            in_specs=[pl.BlockSpec((tb, d), lambda i: (i, 0)),
                      _const_spec(w1f), _const_spec(fw2), _const_spec(fw3p),
                      _const_spec(kw2),
                      _const_spec(fw1t), _const_spec(fw2t), _const_spec(fw3t),
                      _const_spec(bmat)],
            out_specs=pl.BlockSpec((tb, out_w), lambda i: (i, 0)),
        ),
        compiler_params=pltpu.CompilerParams(
            dimension_semantics=("parallel",),
            vmem_limit_bytes=32 * 1024 * 1024),
    )(obs, w1f, fw2, fw3p, kw2, fw1t, fw2t, fw3t, bmat)

    mean = out[:batch, :a]
    k_out = out[:batch, a:a + 1]
    jac_norm = out[:batch, a + 1:a + 2]
    return mean, k_out, jac_norm


def critic_forward(obs, packed):
    (w1, w2, w3, w4p, bmat, dims) = packed
    h1, h2, h3 = dims
    batch = obs.shape[0]
    dc = obs.shape[1]
    tb, b_pad = _batch_tiling(batch)
    obs = obs.astype(jnp.float32)
    if b_pad != batch:
        obs = jnp.pad(obs, ((0, b_pad - batch), (0, 0)))

    kernel = _make_critic_kernel(h1, h2, h3)
    out = pl.pallas_call(
        kernel,
        out_shape=jax.ShapeDtypeStruct((b_pad, LANE), jnp.float32),
        grid_spec=pltpu.PrefetchScalarGridSpec(
            num_scalar_prefetch=0,
            grid=(b_pad // tb,),
            in_specs=[pl.BlockSpec((tb, dc), lambda i: (i, 0)),
                      _const_spec(w1), _const_spec(w2),
                      _const_spec(w3), _const_spec(w4p), _const_spec(bmat)],
            out_specs=pl.BlockSpec((tb, LANE), lambda i: (i, 0)),
        ),
        compiler_params=pltpu.CompilerParams(
            dimension_semantics=("parallel",),
            vmem_limit_bytes=32 * 1024 * 1024),
    )(obs, w1, w2, w3, w4p, bmat)
    return out[:batch, :1]


# ------------------------------ parameter builders -----------------------------

def _linear_init(key, fan_in, fan_out):
    """Deterministic Linear init (uniform +-1/sqrt(fan_in), like PyTorch default)."""
    kw, kb = jax.random.split(key)
    bound = 1.0 / math.sqrt(fan_in)
    w = jax.random.uniform(kw, (fan_in, fan_out), jnp.float32, -bound, bound)
    b = jax.random.uniform(kb, (1, fan_out), jnp.float32, -bound, bound)
    return w, b


def _mlp_init(key, sizes):
    params = []
    keys = jax.random.split(key, len(sizes) - 1)
    for k, (din, dout) in zip(keys, zip(sizes[:-1], sizes[1:])):
        params.append(_linear_init(k, din, dout))
    return params


def _pack_bias_rows(rows_1d, width):
    rows = [jnp.pad(b.reshape(1, -1), ((0, 0), (0, width - b.shape[-1])))
            for b in rows_1d]
    return jnp.concatenate(rows, axis=0).astype(jnp.float32)


class ActorCriticLipsNetPallas:
    """JAX/Pallas mirror of ActorCriticLipsNet inference-time forward passes."""

    is_recurrent = False

    def __init__(self, key, num_actor_obs, num_critic_obs, num_actions,
                 actor_f_hid_dims=(64, 32), actor_k_hid_dims=(64, 32),
                 critic_hidden_dims=(64, 64, 64), init_noise_std=1.0):
        assert len(actor_f_hid_dims) == 2 and len(actor_k_hid_dims) == 2
        assert len(critic_hidden_dims) == 3
        assert num_actions + 2 <= LANE

        kf, kk, kc = jax.random.split(key, 3)
        # LipsNet f_net: [num_actor_obs, *f_hid, num_actions]
        self.f_params = _mlp_init(kf, [num_actor_obs, *actor_f_hid_dims, num_actions])
        # LipsNet k_net: [num_actor_obs, *k_hid, 1]
        self.k_params = _mlp_init(kk, [num_actor_obs, *actor_k_hid_dims, 1])
        # Initialize k_net output so that softplus(bias) ~= k_init (as in LipsNet).
        kw_last, _ = self.k_params[-1]
        kb_last = jnp.full((1, 1), math.log(math.expm1(K_INIT)), jnp.float32)
        self.k_params[-1] = (kw_last * 1e-3, kb_last)
        # Critic MLP: [num_critic_obs, *critic_hid, 1]
        self.c_params = _mlp_init(kc, [num_critic_obs, *critic_hidden_dims, 1])
        # Action std parameter (used only by the stochastic `act`, plain-JAX glue).
        self.std = init_noise_std * jnp.ones((num_actions,), jnp.float32)

        # ---------------- pack parameters for the Pallas kernels ----------------
        (fw1, fb1), (fw2, fb2), (fw3, fb3) = self.f_params
        (kw1, kb1), (kw2, kb2), (kw3, kb3) = self.k_params
        d = num_actor_obs
        h1f, h2f = actor_f_hid_dims
        h1k, h2k = actor_k_hid_dims
        a = num_actions

        w1_fused = jnp.concatenate([fw1, kw1], axis=1)        # (D, H1F+H1K)
        b1_fused = jnp.concatenate([fb1, kb1], axis=1)        # (1, H1F+H1K)
        fw3p = jnp.pad(fw3, ((0, 0), (0, LANE - a)))          # (H2F, 128), zero pad
        bw = _round_up(max(h1f + h1k, h2f, h2k, LANE), LANE)
        # rows: fused b1 | f_b2 | f_b3 | k_b2 | k_b3 | k_w3^T
        bmat = _pack_bias_rows([b1_fused, fb2, fb3, kb2, kb3,
                                jnp.transpose(kw3)], bw)
        self._actor_packed = (w1_fused, fw2, fw3p, kw2,
                              jnp.transpose(fw1), jnp.transpose(fw2),
                              jnp.transpose(fw3), bmat,
                              (d, h1f, h2f, a, h1k, h2k))

        (cw1, cb1), (cw2, cb2), (cw3, cb3), (cw4, cb4) = self.c_params
        ch1, ch2, ch3 = critic_hidden_dims
        cw4p = jnp.pad(cw4, ((0, 0), (0, LANE - 1)))          # (H3, 128), zero pad
        cbw = _round_up(max(ch1, ch2, ch3, LANE), LANE)
        cbmat = _pack_bias_rows([cb1, cb2, cb3, cb4], cbw)
        self._critic_packed = (cw1, cw2, cw3, cw4p, cbmat, (ch1, ch2, ch3))

        self._actor_fn = jax.jit(lambda o: lipsnet_actor_forward(o, self._actor_packed))
        self._critic_fn = jax.jit(lambda o: critic_forward(o, self._critic_packed))

    def act_inference(self, observations, get_info=False):
        mean, k_out, jac_norm = self._actor_fn(observations)
        if get_info:
            return mean, k_out, jac_norm
        return mean

    def act(self, observations, key):
        # Normal(mean, std).sample() -- sampling is host-side glue, not kernel work.
        mean, _, _ = self._actor_fn(observations)
        noise = jax.random.normal(key, mean.shape, mean.dtype)
        return mean + noise * self.std[None, :]

    def evaluate(self, critic_observations):
        return self._critic_fn(critic_observations)

    # TODO(synk): entropy / log_prob of torch.distributions.Normal are analytic
    # scalar formulas (plain-JAX glue); omitted since they have no kernel hot path.


# ------------------------- pure-JAX references (checks) ------------------------

def _ref_actor(obs, f_params, k_params):
    (fw1, fb1), (fw2, fb2), (fw3, fb3) = f_params
    (kw1, kb1), (kw2, kb2), (kw3, kb3) = k_params
    z1 = obs @ fw1 + fb1
    h1 = _lrelu(z1)
    d1 = _lrelu_grad(z1)
    z2 = h1 @ fw2 + fb2
    h2 = _lrelu(z2)
    d2 = _lrelu_grad(z2)
    f_out = h2 @ fw3 + fb3
    # input-side Jacobian (independent formulation to cross-check the kernel)
    t = fw1[None, :, :] * d1[:, None, :]
    t = jnp.einsum('bdh,hk->bdk', t, fw2) * d2[:, None, :]
    jt = jnp.einsum('bdh,ha->bda', t, fw3)
    jac = jnp.sqrt(jnp.sum(jt * jt, axis=(1, 2)))[:, None]
    kh1 = jnp.tanh(obs @ kw1 + kb1)
    kh2 = jnp.tanh(kh1 @ kw2 + kb2)
    k = _softplus(kh2 @ kw3 + kb3)
    return k * f_out / (jac + ACTOR_EPS), k, jac


def _ref_critic(obs, c_params):
    h = obs
    for w, b in c_params[:-1]:
        h = _lrelu(h @ w + b)
    w, b = c_params[-1]
    return h @ w + b


# ------------------------------------ main -------------------------------------

if __name__ == "__main__":
    B = 4
    NUM_ACTOR_OBS = 16
    NUM_CRITIC_OBS = 16
    NUM_ACTIONS = 8

    root = jax.random.PRNGKey(0)
    k_params, k_obs_a, k_obs_c, k_sample = jax.random.split(root, 4)

    model = ActorCriticLipsNetPallas(
        k_params,
        num_actor_obs=NUM_ACTOR_OBS,
        num_critic_obs=NUM_CRITIC_OBS,
        num_actions=NUM_ACTIONS,
        actor_f_hid_dims=(64, 32),
        actor_k_hid_dims=(64, 32),
        critic_hidden_dims=(64, 64, 64),
        init_noise_std=1.0,
    )

    actor_obs = jax.random.normal(k_obs_a, (B, NUM_ACTOR_OBS), jnp.float32)
    critic_obs = jax.random.normal(k_obs_c, (B, NUM_CRITIC_OBS), jnp.float32)

    mean, k_out, jac_norm = model.act_inference(actor_obs, get_info=True)
    sampled = model.act(actor_obs, k_sample)
    value = model.evaluate(critic_obs)
    jax.block_until_ready((mean, k_out, jac_norm, sampled, value))

    # pure-JAX reference at full f32 matmul precision
    with jax.default_matmul_precision("float32"):
        ref_mean, ref_k, ref_jac = _ref_actor(actor_obs, model.f_params, model.k_params)
        ref_value = _ref_critic(critic_obs, model.c_params)

    assert mean.shape == (B, NUM_ACTIONS)
    assert k_out.shape == (B, 1)
    assert jac_norm.shape == (B, 1)
    assert sampled.shape == (B, NUM_ACTIONS)
    assert value.shape == (B, 1)
    assert bool(jnp.all(jnp.isfinite(mean)))
    assert bool(jnp.all(jac_norm >= 0))
    assert bool(jnp.allclose(mean, ref_mean, rtol=5e-2, atol=5e-3)), "actor mean mismatch"
    assert bool(jnp.allclose(k_out, ref_k, rtol=5e-2, atol=5e-3)), "k_out mismatch"
    assert bool(jnp.allclose(jac_norm, ref_jac, rtol=5e-2, atol=5e-3)), "jac_norm mismatch"
    assert bool(jnp.allclose(value, ref_value, rtol=5e-2, atol=5e-3)), "critic value mismatch"

    print("KERNEL_OK")
</pallas_src>

<mosaic_0001>
module attributes {stable_mosaic.version = 11 : i64} {
  func.func @kernel(%arg0: i32, %arg1: memref<8x16xf32, #tpu.memory_space<vmem>>, %arg2: memref<16x128xf32, #tpu.memory_space<vmem>>, %arg3: memref<64x32xf32, #tpu.memory_space<vmem>>, %arg4: memref<32x128xf32, #tpu.memory_space<vmem>>, %arg5: memref<64x32xf32, #tpu.memory_space<vmem>>, %arg6: memref<64x16xf32, #tpu.memory_space<vmem>>, %arg7: memref<32x64xf32, #tpu.memory_space<vmem>>, %arg8: memref<8x32xf32, #tpu.memory_space<vmem>>, %arg9: memref<6x128xf32, #tpu.memory_space<vmem>>, %arg10: memref<8x128xf32, #tpu.memory_space<vmem>>) attributes {dimension_semantics = [#tpu.dimension_semantics<parallel>], iteration_bounds = array<i64: 1>, scalar_prefetch = 0 : i64, scratch_operands = 0 : i64, tpu.core_type = #tpu.core_type<tc>, window_params = [{transform_indices = @transform_0, window_bounds = array<i64: 8, 16>}, {pipeline_mode = #tpu.pipeline_mode<synchronous>, transform_indices = @transform_1, window_bounds = array<i64: 16, 128>}, {pipeline_mode = #tpu.pipeline_mode<synchronous>, transform_indices = @transform_2, window_bounds = array<i64: 64, 32>}, {pipeline_mode = #tpu.pipeline_mode<synchronous>, transform_indices = @transform_3, window_bounds = array<i64: 32, 128>}, {pipeline_mode = #tpu.pipeline_mode<synchronous>, transform_indices = @transform_4, window_bounds = array<i64: 64, 32>}, {pipeline_mode = #tpu.pipeline_mode<synchronous>, transform_indices = @transform_5, window_bounds = array<i64: 64, 16>}, {pipeline_mode = #tpu.pipeline_mode<synchronous>, transform_indices = @transform_6, window_bounds = array<i64: 32, 64>}, {pipeline_mode = #tpu.pipeline_mode<synchronous>, transform_indices = @transform_7, window_bounds = array<i64: 8, 32>}, {pipeline_mode = #tpu.pipeline_mode<synchronous>, transform_indices = @transform_8, window_bounds = array<i64: 6, 128>}, {transform_indices = @transform_9, window_bounds = array<i64: 8, 128>}]} {
    %c0 = arith.constant 0 : index
    %c0_0 = arith.constant 0 : index
    %0 = vector.load %arg1[%c0, %c0_0] : memref<8x16xf32, #tpu.memory_space<vmem>>, vector<8x16xf32>
    %c0_1 = arith.constant 0 : index
    %c0_2 = arith.constant 0 : index
    %1 = vector.load %arg2[%c0_1, %c0_2] : memref<16x128xf32, #tpu.memory_space<vmem>>, vector<16x128xf32>
    %cst = arith.constant dense<0.000000e+00> : vector<8x128xf32>
    %2 = tpu.matmul %0, %1, %cst {dimension_numbers = #tpu.dot_dimension_numbers<[1], [0], [0], [1], [0, 0, 1, 1], [], []>} : vector<8x16xf32>, vector<16x128xf32>, vector<8x128xf32> -> vector<8x128xf32>
    %c0_3 = arith.constant 0 : index
    %c0_4 = arith.constant 0 : index
    %3 = vector.load %arg9[%c0_3, %c0_4] : memref<6x128xf32, #tpu.memory_space<vmem>>, vector<1x128xf32>
    %4 = vector.broadcast %3 : vector<1x128xf32> to vector<8x128xf32>
    %5 = arith.addf %2, %4 : vector<8x128xf32>
    %6 = vector.extract_strided_slice %5 {offsets = [0, 0], sizes = [8, 64], strides = [1, 1]} : vector<8x128xf32> to vector<8x64xf32>
    %7 = vector.extract_strided_slice %5 {offsets = [0, 64], sizes = [8, 64], strides = [1, 1]} : vector<8x128xf32> to vector<8x64xf32>
    %cst_5 = arith.constant 0.000000e+00 : f32
    %8 = vector.broadcast %cst_5 : f32 to vector<8x64xf32>
    %9 = arith.cmpf ogt, %6, %8 : vector<8x64xf32>
    %cst_6 = arith.constant 0.00999999977 : f32
    %10 = vector.broadcast %cst_6 : f32 to vector<8x64xf32>
    %11 = arith.mulf %10, %6 : vector<8x64xf32>
    %12 = arith.select %9, %6, %11 : vector<8x64xi1>, vector<8x64xf32>
    %cst_7 = arith.constant 0.000000e+00 : f32
    %13 = vector.broadcast %cst_7 : f32 to vector<8x64xf32>
    %14 = arith.cmpf ogt, %6, %13 : vector<8x64xf32>
    %cst_8 = arith.constant 1.000000e+00 : f32
    %cst_9 = arith.constant 0.00999999977 : f32
    %15 = vector.broadcast %cst_8 : f32 to vector<8x64xf32>
    %16 = vector.broadcast %cst_9 : f32 to vector<8x64xf32>
    %17 = arith.select %14, %15, %16 : vector<8x64xi1>, vector<8x64xf32>
    %c0_10 = arith.constant 0 : index
    %c0_11 = arith.constant 0 : index
    %18 = vector.load %arg3[%c0_10, %c0_11] : memref<64x32xf32, #tpu.memory_space<vmem>>, vector<64x32xf32>
    %cst_12 = arith.constant dense<0.000000e+00> : vector<8x32xf32>
    %19 = tpu.matmul %12, %18, %cst_12 {dimension_numbers = #tpu.dot_dimension_numbers<[1], [0], [0], [1], [0, 0, 1, 1], [], []>} : vector<8x64xf32>, vector<64x32xf32>, vector<8x32xf32> -> vector<8x32xf32>
    %c1 = arith.constant 1 : index
    %c0_13 = arith.constant 0 : index
    %20 = vector.load %arg9[%c1, %c0_13] : memref<6x128xf32, #tpu.memory_space<vmem>>, vector<1x32xf32>
    %21 = vector.broadcast %20 : vector<1x32xf32> to vector<8x32xf32>
    %22 = arith.addf %19, %21 : vector<8x32xf32>
    %cst_14 = arith.constant 0.000000e+00 : f32
    %23 = vector.broadcast %cst_14 : f32 to vector<8x32xf32>
    %24 = arith.cmpf ogt, %22, %23 : vector<8x32xf32>
    %cst_15 = arith.constant 0.00999999977 : f32
    %25 = vector.broadcast %cst_15 : f32 to vector<8x32xf32>
    %26 = arith.mulf %25, %22 : vector<8x32xf32>
    %27 = arith.select %24, %22, %26 : vector<8x32xi1>, vector<8x32xf32>
    %cst_16 = arith.constant 0.000000e+00 : f32
    %28 = vector.broadcast %cst_16 : f32 to vector<8x32xf32>
    %29 = arith.cmpf ogt, %22, %28 : vector<8x32xf32>
    %cst_17 = arith.constant 1.000000e+00 : f32
    %cst_18 = arith.constant 0.00999999977 : f32
    %30 = vector.broadcast %cst_17 : f32 to vector<8x32xf32>
    %31 = vector.broadcast %cst_18 : f32 to vector<8x32xf32>
    %32 = arith.select %29, %30, %31 : vector<8x32xi1>, vector<8x32xf32>
    %c0_19 = arith.constant 0 : index
    %c0_20 = arith.constant 0 : index
    %33 = vector.load %arg4[%c0_19, %c0_20] : memref<32x128xf32, #tpu.memory_space<vmem>>, vector<32x128xf32>
    %cst_21 = arith.constant dense<0.000000e+00> : vector<8x128xf32>
    %34 = tpu.matmul %27, %33, %cst_21 {dimension_numbers = #tpu.dot_dimension_numbers<[1], [0], [0], [1], [0, 0, 1, 1], [], []>} : vector<8x32xf32>, vector<32x128xf32>, vector<8x128xf32> -> vector<8x128xf32>
    %c2 = arith.constant 2 : index
    %c0_22 = arith.constant 0 : index
    %35 = vector.load %arg9[%c2, %c0_22] : memref<6x128xf32, #tpu.memory_space<vmem>>, vector<1x128xf32>
    %36 = vector.broadcast %35 : vector<1x128xf32> to vector<8x128xf32>
    %37 = arith.addf %34, %36 : vector<8x128xf32>
    %c0_23 = arith.constant 0 : index
    %c0_24 = arith.constant 0 : index
    %38 = vector.load %arg8[%c0_23, %c0_24] : memref<8x32xf32, #tpu.memory_space<vmem>>, vector<8x32xf32>
    %39 = vector.shape_cast %38 : vector<8x32xf32> to vector<1x8x32xf32>
    %40 = vector.shape_cast %32 : vector<8x32xf32> to vector<8x1x32xf32>
    %41 = vector.broadcast %39 : vector<1x8x32xf32> to vector<8x8x32xf32>
    %42 = vector.broadcast %40 : vector<8x1x32xf32> to vector<8x8x32xf32>
    %43 = arith.mulf %41, %42 : vector<8x8x32xf32>
    %44 = vector.shape_cast %43 : vector<8x8x32xf32> to vector<64x32xf32>
    %c0_25 = arith.constant 0 : index
    %c0_26 = arith.constant 0 : index
    %45 = vector.load %arg7[%c0_25, %c0_26] : memref<32x64xf32, #tpu.memory_space<vmem>>, vector<32x64xf32>
    %cst_27 = arith.constant dense<0.000000e+00> : vector<64x64xf32>
    %46 = tpu.matmul %44, %45, %cst_27 {dimension_numbers = #tpu.dot_dimension_numbers<[1], [0], [0], [1], [0, 0, 1, 1], [], []>} : vector<64x32xf32>, vector<32x64xf32>, vector<64x64xf32> -> vector<64x64xf32>
    %47 = vector.shape_cast %46 : vector<64x64xf32> to vector<8x8x64xf32>
    %48 = vector.shape_cast %17 : vector<8x64xf32> to vector<8x1x64xf32>
    %49 = vector.broadcast %48 : vector<8x1x64xf32> to vector<8x8x64xf32>
    %50 = arith.mulf %47, %49 : vector<8x8x64xf32>
    %51 = vector.shape_cast %50 : vector<8x8x64xf32> to vector<64x64xf32>
    %c0_28 = arith.constant 0 : index
    %c0_29 = arith.constant 0 : index
    %52 = vector.load %arg6[%c0_28, %c0_29] : memref<64x16xf32, #tpu.memory_space<vmem>>, vector<64x16xf32>
    %cst_30 = arith.constant dense<0.000000e+00> : vector<64x16xf32>
    %53 = tpu.matmul %51, %52, %cst_30 {dimension_numbers = #tpu.dot_dimension_numbers<[1], [0], [0], [1], [0, 0, 1, 1], [], []>} : vector<64x64xf32>, vector<64x16xf32>, vector<64x16xf32> -> vector<64x16xf32>
    %54 = vector.shape_cast %53 : vector<64x16xf32> to vector<8x8x16xf32>
    %55 = arith.mulf %54, %54 : vector<8x8x16xf32>
    %cst_31 = arith.constant dense<0.000000e+00> : vector<8x8xf32>
    %56 = vector.multi_reduction <add>, %55, %cst_31 [2] : vector<8x8x16xf32> to vector<8x8xf32>
    %cst_32 = arith.constant dense<0.000000e+00> : vector<8xf32>
    %57 = vector.multi_reduction <add>, %56, %cst_32 [1] : vector<8x8xf32> to vector<8xf32>
    %58 = vector.shape_cast %57 : vector<8xf32> to vector<8x1xf32>
    %59 = math.sqrt %58 : vector<8x1xf32>
    %60 = math.tanh %7 : vector<8x64xf32>
    %c0_33 = arith.constant 0 : index
    %c0_34 = arith.constant 0 : index
    %61 = vector.load %arg5[%c0_33, %c0_34] : memref<64x32xf32, #tpu.memory_space<vmem>>, vector<64x32xf32>
    %cst_35 = arith.constant dense<0.000000e+00> : vector<8x32xf32>
    %62 = tpu.matmul %60, %61, %cst_35 {dimension_numbers = #tpu.dot_dimension_numbers<[1], [0], [0], [1], [0, 0, 1, 1], [], []>} : vector<8x64xf32>, vector<64x32xf32>, vector<8x32xf32> -> vector<8x32xf32>
    %c3 = arith.constant 3 : index
    %c0_36 = arith.constant 0 : index
    %63 = vector.load %arg9[%c3, %c0_36] : memref<6x128xf32, #tpu.memory_space<vmem>>, vector<1x32xf32>
    %64 = vector.broadcast %63 : vector<1x32xf32> to vector<8x32xf32>
    %65 = arith.addf %62, %64 : vector<8x32xf32>
    %66 = math.tanh %65 : vector<8x32xf32>
    %c5 = arith.constant 5 : index
    %c0_37 = arith.constant 0 : index
    %67 = vector.load %arg9[%c5, %c0_37] : memref<6x128xf32, #tpu.memory_space<vmem>>, vector<1x32xf32>
    %68 = vector.broadcast %67 : vector<1x32xf32> to vector<8x32xf32>
    %69 = arith.mulf %66, %68 : vector<8x32xf32>
    %cst_38 = arith.constant dense<0.000000e+00> : vector<8xf32>
    %70 = vector.multi_reduction <add>, %69, %cst_38 [1] : vector<8x32xf32> to vector<8xf32>
    %71 = vector.shape_cast %70 : vector<8xf32> to vector<8x1xf32>
    %c4 = arith.constant 4 : index
    %c0_39 = arith.constant 0 : index
    %72 = vector.load %arg9[%c4, %c0_39] : memref<6x128xf32, #tpu.memory_space<vmem>>, vector<1x1xf32>
    %73 = vector.broadcast %72 : vector<1x1xf32> to vector<8x1xf32>
    %74 = arith.addf %71, %73 : vector<8x1xf32>
    %cst_40 = arith.constant 2.000000e+01 : f32
    %75 = vector.broadcast %cst_40 : f32 to vector<8x1xf32>
    %76 = arith.minimumf %74, %75 : vector<8x1xf32>
    %cst_41 = arith.constant 2.000000e+01 : f32
    %77 = vector.broadcast %cst_41 : f32 to vector<8x1xf32>
    %78 = arith.cmpf ogt, %74, %77 : vector<8x1xf32>
    %79 = math.exp %76 : vector<8x1xf32>
    %80 = math.log1p %79 : vector<8x1xf32>
    %81 = arith.select %78, %74, %80 : vector<8x1xi1>, vector<8x1xf32>
    %cst_42 = arith.constant 9.99999974E-5 : f32
    %82 = vector.broadcast %cst_42 : f32 to vector<8x1xf32>
    %83 = arith.addf %59, %82 : vector<8x1xf32>
    %84 = tpu.reciprocal %83 {approx = true} : vector<8x1xf32> -> vector<8x1xf32>
    %85 = arith.mulf %81, %84 : vector<8x1xf32>
    %86 = tpu.iota {dimensions = array<i32: 1>} : vector<8x128xi32>
    %87 = vector.broadcast %85 : vector<8x1xf32> to vector<8x128xf32>
    %88 = arith.mulf %37, %87 : vector<8x128xf32>
    %c8_i32 = arith.constant 8 : i32
    %89 = vector.broadcast %c8_i32 : i32 to vector<8x128xi32>
    %90 = arith.cmpi eq, %86, %89 : vector<8x128xi32>
    %91 = vector.shape_cast %81 : vector<8x1xf32> to vector<8x1xf32>
    %92 = vector.broadcast %91 : vector<8x1xf32> to vector<8x128xf32>
    %93 = arith.select %90, %92, %88 : vector<8x128xi1>, vector<8x128xf32>
    %c9_i32 = arith.constant 9 : i32
    %94 = vector.broadcast %c9_i32 : i32 to vector<8x128xi32>
    %95 = arith.cmpi eq, %86, %94 : vector<8x128xi32>
    %96 = vector.shape_cast %59 : vector<8x1xf32> to vector<8x1xf32>
    %97 = vector.broadcast %96 : vector<8x1xf32> to vector<8x128xf32>
    %98 = arith.select %95, %97, %93 : vector<8x128xi1>, vector<8x128xf32>
    %c0_43 = arith.constant 0 : index
    %c0_44 = arith.constant 0 : index
    %99 = vector.load %arg10[%c0_43, %c0_44] : memref<8x128xf32, #tpu.memory_space<vmem>>, vector<8x128xf32>
    tpu.vector_store %arg10[%c0_43, %c0_44], %98 {strides = array<i32>} : memref<8x128xf32, #tpu.memory_space<vmem>>, vector<8x128xf32>,
    return
  }
  func.func @transform_0(%arg0: i32) -> (i32, i32) {
    %c0_i32 = arith.constant 0 : i32
    %c0_i32_0 = arith.constant 0 : i32
    return %arg0, %c0_i32 : i32, i32
  }
  func.func @transform_1(%arg0: i32) -> (i32, i32) {
    %c0_i32 = arith.constant 0 : i32
    %c0_i32_0 = arith.constant 0 : i32
    %c0_i32_1 = arith.constant 0 : i32
    return %c0_i32, %c0_i32_0 : i32, i32
  }
  func.func @transform_2(%arg0: i32) -> (i32, i32) {
    %c0_i32 = arith.constant 0 : i32
    %c0_i32_0 = arith.constant 0 : i32
    %c0_i32_1 = arith.constant 0 : i32
    return %c0_i32, %c0_i32_0 : i32, i32
  }
  func.func @transform_3(%arg0: i32) -> (i32, i32) {
    %c0_i32 = arith.constant 0 : i32
    %c0_i32_0 = arith.constant 0 : i32
    %c0_i32_1 = arith.constant 0 : i32
    return %c0_i32, %c0_i32_0 : i32, i32
  }
  func.func @transform_4(%arg0: i32) -> (i32, i32) {
    %c0_i32 = arith.constant 0 : i32
    %c0_i32_0 = arith.constant 0 : i32
    %c0_i32_1 = arith.constant 0 : i32
    return %c0_i32, %c0_i32_0 : i32, i32
  }
  func.func @transform_5(%arg0: i32) -> (i32, i32) {
    %c0_i32 = arith.constant 0 : i32
    %c0_i32_0 = arith.constant 0 : i32
    %c0_i32_1 = arith.constant 0 : i32
    return %c0_i32, %c0_i32_0 : i32, i32
  }
  func.func @transform_6(%arg0: i32) -> (i32, i32) {
    %c0_i32 = arith.constant 0 : i32
    %c0_i32_0 = arith.constant 0 : i32
    %c0_i32_1 = arith.constant 0 : i32
    return %c0_i32, %c0_i32_0 : i32, i32
  }
  func.func @transform_7(%arg0: i32) -> (i32, i32) {
    %c0_i32 = arith.constant 0 : i32
    %c0_i32_0 = arith.constant 0 : i32
    %c0_i32_1 = arith.constant 0 : i32
    return %c0_i32, %c0_i32_0 : i32, i32
  }
  func.func @transform_8(%arg0: i32) -> (i32, i32) {
    %c0_i32 = arith.constant 0 : i32
    %c0_i32_0 = arith.constant 0 : i32
    %c0_i32_1 = arith.constant 0 : i32
    return %c0_i32, %c0_i32_0 : i32, i32
  }
  func.func @transform_9(%arg0: i32) -> (i32, i32) {
    %c0_i32 = arith.constant 0 : i32
    %c0_i32_0 = arith.constant 0 : i32
    return %arg0, %c0_i32 : i32, i32
  }
}

</mosaic_0001>

<llo_original>
// kernel: _lambda_.1
$region0: #{_lambda_.1}
  #allocation0 [shape = 'u32[]', space=smem, size = 0x4, offset = 0x4, fixed_abs, tag = 'smem constant byte address 0x4 - core index']
  #allocation1 [shape = 'u32[144,128]{1,0:T(1,128)}', space=vmem, size = 0x12000, scoped, tag = 'internal scratch']
  %s0 = inlined_call_operand.vmem [shape: f32[8,16], index: 0, kind: input, shape index: {}]
  %s1 = inlined_call_operand.hbm [shape: f32[16,128], index: 1, kind: input, shape index: {}]
  %s2 = inlined_call_operand.hbm [shape: f32[64,32], index: 2, kind: input, shape index: {}]
  %s3 = inlined_call_operand.vmem [shape: f32[32,128], index: 3, kind: input, shape index: {}]
  %s4 = inlined_call_operand.hbm [shape: f32[64,32], index: 4, kind: input, shape index: {}]
  %s5 = inlined_call_operand.hbm [shape: f32[64,16], index: 5, kind: input, shape index: {}]
  %s6 = inlined_call_operand.hbm [shape: f32[32,64], index: 6, kind: input, shape index: {}]
  %s7 = inlined_call_operand.hbm [shape: f32[8,32], index: 7, kind: input, shape index: {}]
  %s8 = inlined_call_operand.hbm [shape: f32[6,128], index: 8, kind: input, shape index: {}]
  %s9 = inlined_call_operand.vmem [shape: f32[8,128], index: 9, kind: output, shape index: {}]
  %s10 = sld [smem:[#allocation0]]
  $region74: #{_lambda_.1} parent=0
    _
  %s12 = ssub.s32 1, %s10
  %s13 = scalar_select 0, %s12, %s10
  $region1: #{_lambda_.1} parent=0
    #allocation2 [shape = 'u8[8192]{0}', space=vmem, size = 0x2000, scoped, tag = 'input window, operand 1, single buffered']
    #allocation3 [shape = 's32[1]{0}', space=sflag, size = 0x4, scoped, tag = 'scoped memory for _lambda_.1']
    #allocation4 [shape = 'u8[32768]{0}', space=vmem, size = 0x8000, scoped, tag = 'input window, operand 2, single buffered']
    #allocation5 [shape = 's32[1]{0}', space=sflag, size = 0x4, scoped, tag = 'scoped memory for _lambda_.1']
    #allocation6 [shape = 'u8[32768]{0}', space=vmem, size = 0x8000, scoped, tag = 'input window, operand 4, single buffered']
    #allocation7 [shape = 'u8[32768]{0}', space=vmem, size = 0x8000, scoped, tag = 'input window, operand 5, single buffered']
    #allocation8 [shape = 's32[1]{0}', space=sflag, size = 0x4, scoped, tag = 'scoped memory for _lambda_.1']
    #allocation9 [shape = 'u8[16384]{0}', space=vmem, size = 0x4000, scoped, tag = 'input window, operand 6, single buffered']
    #allocation10 [shape = 'u8[4096]{0}', space=vmem, size = 0x1000, scoped, tag = 'input window, operand 7, single buffered']
    #allocation11 [shape = 's32[1]{0}', space=sflag, size = 0x4, scoped, tag = 'scoped memory for _lambda_.1']
    #allocation12 [shape = 'u8[4096]{0}', space=vmem, size = 0x1000, scoped, tag = 'input window, operand 8, single buffered']
    %14 = vsyncpa [#allocation3], 0
    %15 = vsyncpa [#allocation5], 0
    %16 = vsyncpa [#allocation8], 0
    %17 = vsyncpa [#allocation11], 0
    // Predicated region
    $region2: #{_lambda_.1} parent=1 // pred_check
      _
    $region3: #{_lambda_.1} parent=1 // pred_check_branch
      %19 = sbr.rel (0) target = $region5
    $region4: #{_lambda_.1} parent=1 // pred_region
      _
    $region5: #{_lambda_.1} parent=1 // pred_fallthru
      _
    // Predicated region
    $region6: #{_lambda_.1} parent=1 // pred_check
      _
    $region7: #{_lambda_.1} parent=1 // pred_check_branch
      %21 = sbr.rel (0) target = $region9
    $region8: #{_lambda_.1} parent=1 // pred_region
      %s23 = ssub.s32 256, 256
      %24 = vsyncadd [#allocation3], %s23
      %s25 = sshll.u32 [#allocation2], 4
      %s26 = int_to_ptr.vmem [resolvable:$true] %s25
      %31 = dma.hbm_to_vmem [thread:$0]  %s1, 256, %s26, [#allocation3], 128, 128, 8
    $region9: #{_lambda_.1} parent=1 // pred_fallthru
      _
    // Predicated region
    $region10: #{_lambda_.1} parent=1 // pred_check
      _
    $region11: #{_lambda_.1} parent=1 // pred_check_branch
      %33 = sbr.rel (0) target = $region13
    $region12: #{_lambda_.1} parent=1 // pred_region
      %s35 = ssub.s32 1024, 1024
      %36 = vsyncadd [#allocation5], %s35
      %s37 = sshll.u32 [#allocation4], 4
      %s38 = int_to_ptr.vmem [resolvable:$true] %s37
      %43 = dma.hbm_to_vmem [thread:$0]  %s2, 1024, %s38, [#allocation5], 128, 128, 8
    $region13: #{_lambda_.1} parent=1 // pred_fallthru
      _
    // Predicated region
    $region14: #{_lambda_.1} parent=1 // pred_check
      _
    $region15: #{_lambda_.1} parent=1 // pred_check_branch
      %45 = sbr.rel (0) target = $region17
    $region16: #{_lambda_.1} parent=1 // pred_region
      _
    $region17: #{_lambda_.1} parent=1 // pred_fallthru
      _
    // Predicated region
    $region18: #{_lambda_.1} parent=1 // pred_check
      _
    $region19: #{_lambda_.1} parent=1 // pred_check_branch
      %47 = sbr.rel (0) target = $region21
    $region20: #{_lambda_.1} parent=1 // pred_region
      %s49 = ssub.s32 1024, 1024
      %50 = vsyncadd [#allocation5], %s49
      %s51 = sshll.u32 [#allocation6], 4
      %s52 = int_to_ptr.vmem [resolvable:$true] %s51
      %57 = dma.hbm_to_vmem [thread:$0]  %s4, 1024, %s52, [#allocation5], 128, 128, 8
    $region21: #{_lambda_.1} parent=1 // pred_fallthru
      _
    // Predicated region
    $region22: #{_lambda_.1} parent=1 // pred_check
      _
    $region23: #{_lambda_.1} parent=1 // pred_check_branch
      %59 = sbr.rel (0) target = $region25
    $region24: #{_lambda_.1} parent=1 // pred_region
      %s61 = ssub.s32 1024, 1024
      %62 = vsyncadd [#allocation8], %s61
      %s63 = sshll.u32 [#allocation7], 4
      %s64 = int_to_ptr.vmem [resolvable:$true] %s63
      %69 = dma.hbm_to_vmem [thread:$0]  %s5, 1024, %s64, [#allocation8], 128, 128, 8
    $region25: #{_lambda_.1} parent=1 // pred_fallthru
      _
    // Predicated region
    $region26: #{_lambda_.1} parent=1 // pred_check
      _
    $region27: #{_lambda_.1} parent=1 // pred_check_branch
      %71 = sbr.rel (0) target = $region29
    $region28: #{_lambda_.1} parent=1 // pred_region
      %s73 = ssub.s32 512, 512
      %74 = vsyncadd [#allocation8], %s73
      %s75 = sshll.u32 [#allocation9], 4
      %s76 = int_to_ptr.vmem [resolvable:$true] %s75
      %81 = dma.hbm_to_vmem [thread:$0]  %s6, 512, %s76, [#allocation8], 128, 128, 8
    $region29: #{_lambda_.1} parent=1 // pred_fallthru
      _
    // Predicated region
    $region30: #{_lambda_.1} parent=1 // pred_check
      _
    $region31: #{_lambda_.1} parent=1 // pred_check_branch
      %83 = sbr.rel (0) target = $region33
    $region32: #{_lambda_.1} parent=1 // pred_region
      %s85 = ssub.s32 128, 128
      %86 = vsyncadd [#allocation11], %s85
      %s88 = sshll.u32 [#allocation10], 4
      %s89 = int_to_ptr.vmem [resolvable:$true] %s88
      %91 = dma.hbm_to_vmem [thread:$0]  %s7, 128, %s89, [#allocation11]
    $region33: #{_lambda_.1} parent=1 // pred_fallthru
      _
    // Predicated region
    $region34: #{_lambda_.1} parent=1 // pred_check
      _
    $region35: #{_lambda_.1} parent=1 // pred_check_branch
      %93 = sbr.rel (0) target = $region37
    $region36: #{_lambda_.1} parent=1 // pred_region
      %s95 = ssub.s32 128, 128
      %96 = vsyncadd [#allocation11], %s95
      %s98 = sshll.u32 [#allocation12], 4
      %s99 = int_to_ptr.vmem [resolvable:$true] %s98
      %101 = dma.hbm_to_vmem [thread:$0]  %s8, 128, %s99, [#allocation11]
    $region37: #{_lambda_.1} parent=1 // pred_fallthru
      _
    // Predicated region
    $region38: #{_lambda_.1} parent=1 // pred_check
      _
    $region39: #{_lambda_.1} parent=1 // pred_check_branch
      %103 = sbr.rel (0) target = $region41
    $region40: #{_lambda_.1} parent=1 // pred_region
      %104 = dma.done [#allocation3], 256
    $region41: #{_lambda_.1} parent=1 // pred_fallthru
      _
    // Predicated region
    $region42: #{_lambda_.1} parent=1 // pred_check
      _
    $region43: #{_lambda_.1} parent=1 // pred_check_branch
      %106 = sbr.rel (0) target = $region45
    $region44: #{_lambda_.1} parent=1 // pred_region
      %107 = dma.done [#allocation5], 1024
    $region45: #{_lambda_.1} parent=1 // pred_fallthru
      _
    // Predicated region
    $region46: #{_lambda_.1} parent=1 // pred_check
      _
    $region47: #{_lambda_.1} parent=1 // pred_check_branch
      %109 = sbr.rel (0) target = $region49
    $region48: #{_lambda_.1} parent=1 // pred_region
      %110 = dma.done [#allocation5], 1024
    $region49: #{_lambda_.1} parent=1 // pred_fallthru
      _
    // Predicated region
    $region50: #{_lambda_.1} parent=1 // pred_check
      _
    $region51: #{_lambda_.1} parent=1 // pred_check_branch
      %112 = sbr.rel (0) target = $region53
    $region52: #{_lambda_.1} parent=1 // pred_region
      %113 = dma.done [#allocation8], 1024
    $region53: #{_lambda_.1} parent=1 // pred_fallthru
      _
    // Predicated region
    $region54: #{_lambda_.1} parent=1 // pred_check
      _
    $region55: #{_lambda_.1} parent=1 // pred_check_branch
      %115 = sbr.rel (0) target = $region57
    $region56: #{_lambda_.1} parent=1 // pred_region
      %116 = dma.done [#allocation8], 512
    $region57: #{_lambda_.1} parent=1 // pred_fallthru
      _
    // Predicated region
    $region58: #{_lambda_.1} parent=1 // pred_check
      _
    $region59: #{_lambda_.1} parent=1 // pred_check_branch
      %118 = sbr.rel (0) target = $region61
    $region60: #{_lambda_.1} parent=1 // pred_region
      %119 = dma.done [#allocation11], 128
    $region61: #{_lambda_.1} parent=1 // pred_fallthru
      _
    // Predicated region
    $region62: #{_lambda_.1} parent=1 // pred_check
      _
    $region63: #{_lambda_.1} parent=1 // pred_check_branch
      %121 = sbr.rel (0) target = $region65
    $region64: #{_lambda_.1} parent=1 // pred_region
      %122 = dma.done [#allocation11], 128
    $region65: #{_lambda_.1} parent=1 // pred_fallthru
      _
    %v123 = vld [vmem:[%s0] sm:$0xff]
    %v124 = vld [vmem:[#allocation2] sm:$0xff]
    %v125 = vld [vmem:[#allocation2 + $0x8] sm:$0xff]
    %v126 = vld [vmem:[#allocation12] sm:$0x1]
    %v127 = vlaneseq
    %v128 = vshrl.u32 %v127, 7
    %v129 = vsub.s32 0, %v128
    %v130 = vrot.slane %v126, %v129
    %vm131 = vcmask 130048
    %v133 = vsel %vm131, %v123, 0
    %135 = vmatprep.subr.mxu0 0.0
    %136 = vmatpush1.msra.mxu0 %v124
    %137 = vmatprep.subr.mxu0 0.0
    %138 = vmatpush1.msra.mxu0 %v125
    %139 = vmatprep.subr.mxu0 0.0
    %140 = vmatpush1.msra.mxu0 0.0
    %141 = vmatprep.subr.mxu0 0.0
    %142 = vmatpush1.msra.mxu0 0.0
    %143 = vmatprep.subr.mxu0 0.0
    %144 = vmatpush1.msra.mxu0 0.0
    %145 = vmatprep.subr.mxu0 0.0
    %146 = vmatpush1.msra.mxu0 0.0
    %147 = vmatprep.subr.mxu0 0.0
    %148 = vmatpush1.msra.mxu0 0.0
    %149 = vmatprep.subr.mxu0 0.0
    %150 = vmatpush1.msra.mxu0 0.0
    %151 = vmatprep.subr.mxu0 0.0
    %152 = vmatpush1.msra.mxu0 0.0
    %153 = vmatprep.subr.mxu0 0.0
    %154 = vmatpush1.msra.mxu0 0.0
    %155 = vmatprep.subr.mxu0 0.0
    %156 = vmatpush1.msra.mxu0 0.0
    %157 = vmatprep.subr.mxu0 0.0
    %158 = vmatpush1.msra.mxu0 0.0
    %159 = vmatprep.subr.mxu0 0.0
    %160 = vmatpush1.msra.mxu0 0.0
    %161 = vmatprep.subr.mxu0 0.0
    %162 = vmatpush1.msra.mxu0 0.0
    %163 = vmatprep.subr.mxu0 0.0
    %164 = vmatpush1.msra.mxu0 0.0
    %165 = vmatprep.subr.mxu0 0.0
    %166 = vmatpush1.msra.mxu0 0.0
    %167 = vmatprep.subr.mxu0 0.0
    %168 = vmatpush1.msra.mxu0 0.0
    %169 = vmatprep.subr.mxu0 0.0
    %170 = vmatpush1.msra.mxu0 0.0
    %171 = vmatprep.subr.mxu0 0.0
    %172 = vmatpush1.msra.mxu0 0.0
    %173 = vmatprep.subr.mxu0 0.0
    %174 = vmatpush1.msra.mxu0 0.0
    %175 = vmatprep.subr.mxu0 0.0
    %176 = vmatpush1.msra.mxu0 0.0
    %177 = vmatprep.subr.mxu0 0.0
    %178 = vmatpush1.msra.mxu0 0.0
    %179 = vmatprep.subr.mxu0 0.0
    %180 = vmatpush1.msra.mxu0 0.0
    %181 = vmatprep.subr.mxu0 0.0
    %182 = vmatpush1.msra.mxu0 0.0
    %183 = vmatprep.subr.mxu0 0.0
    %184 = vmatpush1.msra.mxu0 0.0
    %185 = vmatprep.subr.mxu0 0.0
    %186 = vmatpush1.msra.mxu0 0.0
    %187 = vmatprep.subr.mxu0 0.0
    %188 = vmatpush1.msra.mxu0 0.0
    %189 = vmatprep.subr.mxu0 0.0
    %190 = vmatpush1.msra.mxu0 0.0
    %191 = vmatprep.subr.mxu0 0.0
    %192 = vmatpush1.msra.mxu0 0.0
    %193 = vmatprep.subr.mxu0 0.0
    %194 = vmatpush1.msra.mxu0 0.0
    %195 = vmatprep.subr.mxu0 0.0
    %196 = vmatpush1.msra.mxu0 0.0
    %197 = vmatprep.subr.mxu0 0.0
    %198 = vmatpush1.msra.mxu0 0.0
    %199 = vmatprep.mubr.f32.mxu0 0.0
    %200 = vmatmul.mubr.f32.gmra.mrb[0].mxu0 %v133
    %v201 = vpop.f32.mrb[0].mxu0
    %v202 = vadd.f32 %v130, %v201
    %v203 = vpop.f32.mrb[0].mxu0
    %204 = vdwg.mxu0
    %vm205 = vcmp.gt.f32.partialorder %v202, 0.0
    %v206 = vmul.f32 %v202, 0.01
    %v207 = vsel %vm205, %v202, %v206
    %v208 = vsel %vm205, 1.0, 0.01
    %v209 = vld [vmem:[#allocation4] sm:$0xff]
    %v210 = vld [vmem:[#allocation4 + $0x8] sm:$0xff]
    %v211 = vld [vmem:[#allocation4 + $0x10] sm:$0xff]
    %v212 = vld [vmem:[#allocation4 + $0x18] sm:$0xff]
    %v213 = vld [vmem:[#allocation4 + $0x20] sm:$0xff]
    %v214 = vld [vmem:[#allocation4 + $0x28] sm:$0xff]
    %v215 = vld [vmem:[#allocation4 + $0x30] sm:$0xff]
    %v216 = vld [vmem:[#allocation4 + $0x38] sm:$0xff]
    %v217 = vld [vmem:[#allocation12 + $0x1] sm:$0x1]
    %v218 = vlaneseq
    %v219 = vshrl.u32 %v218, 7
    %v220 = vsub.s32 0, %v219
    %v221 = vrot.slane %v217, %v220
    %vm222 = vcmask 523264
    %v224 = vsel %vm222, %v207, 0
    %226 = vmatprep.subr.mxu0 0.0
    %227 = vmatpush1.msra.mxu0 %v209
    %228 = vmatprep.subr.mxu0 0.0
    %229 = vmatpush1.msra.mxu0 %v210
    %230 = vmatprep.subr.mxu0 0.0
    %231 = vmatpush1.msra.mxu0 %v211
    %232 = vmatprep.subr.mxu0 0.0
    %233 = vmatpush1.msra.mxu0 %v212
    %234 = vmatprep.subr.mxu0 0.0
    %235 = vmatpush1.msra.mxu0 %v213
    %236 = vmatprep.subr.mxu0 0.0
    %237 = vmatpush1.msra.mxu0 %v214
    %238 = vmatprep.subr.mxu0 0.0
    %239 = vmatpush1.msra.mxu0 %v215
    %240 = vmatprep.subr.mxu0 0.0
    %241 = vmatpush1.msra.mxu0 %v216
    %242 = vmatprep.subr.mxu0 0.0
    %243 = vmatpush1.msra.mxu0 0.0
    %244 = vmatprep.subr.mxu0 0.0
    %245 = vmatpush1.msra.mxu0 0.0
    %246 = vmatprep.subr.mxu0 0.0
    %247 = vmatpush1.msra.mxu0 0.0
    %248 = vmatprep.subr.mxu0 0.0
    %249 = vmatpush1.msra.mxu0 0.0
    %250 = vmatprep.subr.mxu0 0.0
    %251 = vmatpush1.msra.mxu0 0.0
    %252 = vmatprep.subr.mxu0 0.0
    %253 = vmatpush1.msra.mxu0 0.0
    %254 = vmatprep.subr.mxu0 0.0
    %255 = vmatpush1.msra.mxu0 0.0
    %256 = vmatprep.subr.mxu0 0.0
    %257 = vmatpush1.msra.mxu0 0.0
    %258 = vmatprep.subr.mxu0 0.0
    %259 = vmatpush1.msra.mxu0 0.0
    %260 = vmatprep.subr.mxu0 0.0
    %261 = vmatpush1.msra.mxu0 0.0
    %262 = vmatprep.subr.mxu0 0.0
    %263 = vmatpush1.msra.mxu0 0.0
    %264 = vmatprep.subr.mxu0 0.0
    %265 = vmatpush1.msra.mxu0 0.0
    %266 = vmatprep.subr.mxu0 0.0
    %267 = vmatpush1.msra.mxu0 0.0
    %268 = vmatprep.subr.mxu0 0.0
    %269 = vmatpush1.msra.mxu0 0.0
    %270 = vmatprep.subr.mxu0 0.0
    %271 = vmatpush1.msra.mxu0 0.0
    %272 = vmatprep.subr.mxu0 0.0
    %273 = vmatpush1.msra.mxu0 0.0
    %274 = vmatprep.subr.mxu0 0.0
    %275 = vmatpush1.msra.mxu0 0.0
    %276 = vmatprep.subr.mxu0 0.0
    %277 = vmatpush1.msra.mxu0 0.0
    %278 = vmatprep.subr.mxu0 0.0
    %279 = vmatpush1.msra.mxu0 0.0
    %280 = vmatprep.subr.mxu0 0.0
    %281 = vmatpush1.msra.mxu0 0.0
    %282 = vmatprep.subr.mxu0 0.0
    %283 = vmatpush1.msra.mxu0 0.0
    %284 = vmatprep.subr.mxu0 0.0
    %285 = vmatpush1.msra.mxu0 0.0
    %286 = vmatprep.subr.mxu0 0.0
    %287 = vmatpush1.msra.mxu0 0.0
    %288 = vmatprep.subr.mxu0 0.0
    %289 = vmatpush1.msra.mxu0 0.0
    %290 = vmatprep.mubr.f32.mxu0 0.0
    %291 = vmatmul.mubr.f32.gmra.mrb[0].mxu0 %v224
    %v292 = vpop.f32.mrb[0].mxu0
    %v293 = vadd.f32 %v221, %v292
    %v294 = vpop.f32.mrb[0].mxu0
    %295 = vdwg.mxu0
    %vm296 = vcmp.gt.f32.partialorder %v293, 0.0
    %v297 = vmul.f32 %v293, 0.01
    %v298 = vsel %vm296, %v293, %v297
    %v299 = vsel %vm296, 1.0, 0.01
    %v300 = vld [vmem:[%s3] sm:$0xff]
    %v301 = vld [vmem:[%s3 + $0x8] sm:$0xff]
    %v302 = vld [vmem:[%s3 + $0x10] sm:$0xff]
    %v303 = vld [vmem:[%s3 + $0x18] sm:$0xff]
    %v304 = vld [vmem:[#allocation12 + $0x2] sm:$0x1]
    %v305 = vlaneseq
    %v306 = vshrl.u32 %v305, 7
    %v307 = vsub.s32 0, %v306
    %v308 = vrot.slane %v304, %v307
    %vm309 = vcmask 261120
    %v311 = vsel %vm309, %v298, 0
    %313 = vmatprep.subr.mxu0 0.0
    %314 = vmatpush1.msra.mxu0 %v300
    %315 = vmatprep.subr.mxu0 0.0
    %316 = vmatpush1.msra.mxu0 %v301
    %317 = vmatprep.subr.mxu0 0.0
    %318 = vmatpush1.msra.mxu0 %v302
    %319 = vmatprep.subr.mxu0 0.0
    %320 = vmatpush1.msra.mxu0 %v303
    %321 = vmatprep.subr.mxu0 0.0
    %322 = vmatpush1.msra.mxu0 0.0
    %323 = vmatprep.subr.mxu0 0.0
    %324 = vmatpush1.msra.mxu0 0.0
    %325 = vmatprep.subr.mxu0 0.0
    %326 = vmatpush1.msra.mxu0 0.0
    %327 = vmatprep.subr.mxu0 0.0
    %328 = vmatpush1.msra.mxu0 0.0
    %329 = vmatprep.subr.mxu0 0.0
    %330 = vmatpush1.msra.mxu0 0.0
    %331 = vmatprep.subr.mxu0 0.0
    %332 = vmatpush1.msra.mxu0 0.0
    %333 = vmatprep.subr.mxu0 0.0
    %334 = vmatpush1.msra.mxu0 0.0
    %335 = vmatprep.subr.mxu0 0.0
    %336 = vmatpush1.msra.mxu0 0.0
    %337 = vmatprep.subr.mxu0 0.0
    %338 = vmatpush1.msra.mxu0 0.0
    %339 = vmatprep.subr.mxu0 0.0
    %340 = vmatpush1.msra.mxu0 0.0
    %341 = vmatprep.subr.mxu0 0.0
    %342 = vmatpush1.msra.mxu0 0.0
    %343 = vmatprep.subr.mxu0 0.0
    %344 = vmatpush1.msra.mxu0 0.0
    %345 = vmatprep.subr.mxu0 0.0
    %346 = vmatpush1.msra.mxu0 0.0
    %347 = vmatprep.subr.mxu0 0.0
    %348 = vmatpush1.msra.mxu0 0.0
    %349 = vmatprep.subr.mxu0 0.0
    %350 = vmatpush1.msra.mxu0 0.0
    %351 = vmatprep.subr.mxu0 0.0
    %352 = vmatpush1.msra.mxu0 0.0
    %353 = vmatprep.subr.mxu0 0.0
    %354 = vmatpush1.msra.mxu0 0.0
    %355 = vmatprep.subr.mxu0 0.0
    %356 = vmatpush1.msra.mxu0 0.0
    %357 = vmatprep.subr.mxu0 0.0
    %358 = vmatpush1.msra.mxu0 0.0
    %359 = vmatprep.subr.mxu0 0.0
    %360 = vmatpush1.msra.mxu0 0.0
    %361 = vmatprep.subr.mxu0 0.0
    %362 = vmatpush1.msra.mxu0 0.0
    %363 = vmatprep.subr.mxu0 0.0
    %364 = vmatpush1.msra.mxu0 0.0
    %365 = vmatprep.subr.mxu0 0.0
    %366 = vmatpush1.msra.mxu0 0.0
    %367 = vmatprep.subr.mxu0 0.0
    %368 = vmatpush1.msra.mxu0 0.0
    %369 = vmatprep.subr.mxu0 0.0
    %370 = vmatpush1.msra.mxu0 0.0
    %371 = vmatprep.subr.mxu0 0.0
    %372 = vmatpush1.msra.mxu0 0.0
    %373 = vmatprep.subr.mxu0 0.0
    %374 = vmatpush1.msra.mxu0 0.0
    %375 = vmatprep.subr.mxu0 0.0
    %376 = vmatpush1.msra.mxu0 0.0
    %377 = vmatprep.mubr.f32.mxu0 0.0
    %378 = vmatmul.mubr.f32.gmra.mrb[0].mxu0 %v311
    %v379 = vpop.f32.mrb[0].mxu0
    %v380 = vadd.f32 %v308, %v379
    %v381 = vpop.f32.mrb[0].mxu0
    %382 = vdwg.mxu0
    %v383 = vld [vmem:[#allocation10] sm:$0xff]
    %v385 = vcombine.high %v299, %v299
    %v387 = vunpack.c.l.s4 1966171168
    %v388 = vunpack.c.0.s8 %v387
    %v389 = vlaneseq
    %v390 = vshrl.u32 %v389, 7
    %v391 = vsub.s32 %v388, %v390
    %v392 = vrot.slane %v299, %v391
    %v394 = vunpack.c.l.s4 1966171168
    %v395 = vunpack.c.0.s8 %v394
    %v396 = vlaneseq
    %v397 = vshrl.u32 %v396, 7
    %v398 = vsub.s32 %v395, %v397
    %v399 = vrot.slane %v385, %v398
    %v400 = vcombine.high %v392, %v392
    %v401 = vcombine.high %v399, %v399
    %v403 = vunpack.c.l.s4 1966171168
    %v404 = vunpack.c.0.s8 %v403
    %v405 = vlaneseq
    %v406 = vshrl.u32 %v405, 7
    %v407 = vsub.s32 %v404, %v406
    %v408 = vrot.slane %v392, %v407
    %v410 = vunpack.c.l.s4 1966171168
    %v411 = vunpack.c.0.s8 %v410
    %v412 = vlaneseq
    %v413 = vshrl.u32 %v412, 7
    %v414 = vsub.s32 %v411, %v413
    %v415 = vrot.slane %v399, %v414
    %v417 = vunpack.c.l.s4 1966171168
    %v418 = vunpack.c.0.s8 %v417
    %v419 = vlaneseq
    %v420 = vshrl.u32 %v419, 7
    %v421 = vsub.s32 %v418, %v420
    %v422 = vrot.slane %v400, %v421
    %v424 = vunpack.c.l.s4 1966171168
    %v425 = vunpack.c.0.s8 %v424
    %v426 = vlaneseq
    %v427 = vshrl.u32 %v426, 7
    %v428 = vsub.s32 %v425, %v427
    %v429 = vrot.slane %v401, %v428
    %v430 = vcombine.high %v408, %v408
    %v431 = vcombine.high %v415, %v415
    %v432 = vcombine.high %v422, %v422
    %v433 = vcombine.high %v429, %v429
    %v434 = vlaneseq
    %v435 = vshrl.u32 %v434, 7
    %v436 = vsub.s32 0, %v435
    %v437 = vrot.slane %v408, %v436
    %v438 = vlaneseq
    %v439 = vshrl.u32 %v438, 7
    %v440 = vsub.s32 0, %v439
    %v441 = vrot.slane %v422, %v440
    %v442 = vlaneseq
    %v443 = vshrl.u32 %v442, 7
    %v444 = vsub.s32 0, %v443
    %v445 = vrot.slane %v430, %v444
    %v446 = vlaneseq
    %v447 = vshrl.u32 %v446, 7
    %v448 = vsub.s32 0, %v447
    %v449 = vrot.slane %v432, %v448
    %v450 = vlaneseq
    %v451 = vshrl.u32 %v450, 7
    %v452 = vsub.s32 0, %v451
    %v453 = vrot.slane %v415, %v452
    %v454 = vlaneseq
    %v455 = vshrl.u32 %v454, 7
    %v456 = vsub.s32 0, %v455
    %v457 = vrot.slane %v429, %v456
    %v458 = vlaneseq
    %v459 = vshrl.u32 %v458, 7
    %v460 = vsub.s32 0, %v459
    %v461 = vrot.slane %v431, %v460
    %v462 = vlaneseq
    %v463 = vshrl.u32 %v462, 7
    %v464 = vsub.s32 0, %v463
    %v465 = vrot.slane %v433, %v464
    %v474 = vmul.f32 %v383, %v437
    %v475 = vmul.f32 %v383, %v441
    %v476 = vmul.f32 %v383, %v445
    %v477 = vmul.f32 %v383, %v449
    %v478 = vmul.f32 %v383, %v453
    %v479 = vmul.f32 %v383, %v457
    %v480 = vmul.f32 %v383, %v461
    %v481 = vmul.f32 %v383, %v465
    %v482 = vld [vmem:[#allocation9] sm:$0xff]
    %v483 = vld [vmem:[#allocation9 + $0x8] sm:$0xff]
    %v484 = vld [vmem:[#allocation9 + $0x10] sm:$0xff]
    %v485 = vld [vmem:[#allocation9 + $0x18] sm:$0xff]
    %v487 = vsel %vm309, %v474, 0
    %v490 = vsel %vm309, %v475, 0
    %v493 = vsel %vm309, %v476, 0
    %v496 = vsel %vm309, %v477, 0
    %v499 = vsel %vm309, %v478, 0
    %v502 = vsel %vm309, %v479, 0
    %v505 = vsel %vm309, %v480, 0
    %v508 = vsel %vm309, %v481, 0
    %510 = vmatprep.subr.mxu0 0.0
    %511 = vmatpush1.msra.mxu0 %v482
    %512 = vmatprep.subr.mxu0 0.0
    %513 = vmatpush1.msra.mxu0 %v483
    %514 = vmatprep.subr.mxu0 0.0
    %515 = vmatpush1.msra.mxu0 %v484
    %516 = vmatprep.subr.mxu0 0.0
    %517 = vmatpush1.msra.mxu0 %v485
    %518 = vmatprep.subr.mxu0 0.0
    %519 = vmatpush1.msra.mxu0 0.0
    %520 = vmatprep.subr.mxu0 0.0
    %521 = vmatpush1.msra.mxu0 0.0
    %522 = vmatprep.subr.mxu0 0.0
    %523 = vmatpush1.msra.mxu0 0.0
    %524 = vmatprep.subr.mxu0 0.0
    %525 = vmatpush1.msra.mxu0 0.0
    %526 = vmatprep.subr.mxu0 0.0
    %527 = vmatpush1.msra.mxu0 0.0
    %528 = vmatprep.subr.mxu0 0.0
    %529 = vmatpush1.msra.mxu0 0.0
    %530 = vmatprep.subr.mxu0 0.0
    %531 = vmatpush1.msra.mxu0 0.0
    %532 = vmatprep.subr.mxu0 0.0
    %533 = vmatpush1.msra.mxu0 0.0
    %534 = vmatprep.subr.mxu0 0.0
    %535 = vmatpush1.msra.mxu0 0.0
    %536 = vmatprep.subr.mxu0 0.0
    %537 = vmatpush1.msra.mxu0 0.0
    %538 = vmatprep.subr.mxu0 0.0
    %539 = vmatpush1.msra.mxu0 0.0
    %540 = vmatprep.subr.mxu0 0.0
    %541 = vmatpush1.msra.mxu0 0.0
    %542 = vmatprep.subr.mxu0 0.0
    %543 = vmatpush1.msra.mxu0 0.0
    %544 = vmatprep.subr.mxu0 0.0
    %545 = vmatpush1.msra.mxu0 0.0
    %546 = vmatprep.subr.mxu0 0.0
    %547 = vmatpush1.msra.mxu0 0.0
    %548 = vmatprep.subr.mxu0 0.0
    %549 = vmatpush1.msra.mxu0 0.0
    %550 = vmatprep.subr.mxu0 0.0
    %551 = vmatpush1.msra.mxu0 0.0
    %552 = vmatprep.subr.mxu0 0.0
    %553 = vmatpush1.msra.mxu0 0.0
    %554 = vmatprep.subr.mxu0 0.0
    %555 = vmatpush1.msra.mxu0 0.0
    %556 = vmatprep.subr.mxu0 0.0
    %557 = vmatpush1.msra.mxu0 0.0
    %558 = vmatprep.subr.mxu0 0.0
    %559 = vmatpush1.msra.mxu0 0.0
    %560 = vmatprep.subr.mxu0 0.0
    %561 = vmatpush1.msra.mxu0 0.0
    %562 = vmatprep.subr.mxu0 0.0
    %563 = vmatpush1.msra.mxu0 0.0
    %564 = vmatprep.subr.mxu0 0.0
    %565 = vmatpush1.msra.mxu0 0.0
    %566 = vmatprep.subr.mxu0 0.0
    %567 = vmatpush1.msra.mxu0 0.0
    %568 = vmatprep.subr.mxu0 0.0
    %569 = vmatpush1.msra.mxu0 0.0
    %570 = vmatprep.subr.mxu0 0.0
    %571 = vmatpush1.msra.mxu0 0.0
    %572 = vmatprep.subr.mxu0 0.0
    %573 = vmatpush1.msra.mxu0 0.0
    %574 = vmatprep.mubr.f32.mxu0 0.0
    %575 = vmatmul.mubr.f32.gmra.mrb[0].mxu0 %v487
    %v576 = vpop.f32.mrb[0].mxu0
    %v577 = vadd.f32 0.0, %v576
    %v578 = vpop.f32.mrb[0].mxu0
    %579 = vmatprep.mubr.f32.mxu0 0.0
    %580 = vmatmul.mubr.f32.gmra.mrb[0].mxu0 %v490
    %v581 = vpop.f32.mrb[0].mxu0
    %v582 = vadd.f32 0.0, %v581
    %v583 = vpop.f32.mrb[0].mxu0
    %584 = vmatprep.mubr.f32.mxu0 0.0
    %585 = vmatmul.mubr.f32.gmra.mrb[0].mxu0 %v493
    %v586 = vpop.f32.mrb[0].mxu0
    %v587 = vadd.f32 0.0, %v586
    %v588 = vpop.f32.mrb[0].mxu0
    %589 = vmatprep.mubr.f32.mxu0 0.0
    %590 = vmatmul.mubr.f32.gmra.mrb[0].mxu0 %v496
    %v591 = vpop.f32.mrb[0].mxu0
    %v592 = vadd.f32 0.0, %v591
    %v593 = vpop.f32.mrb[0].mxu0
    %594 = vmatprep.mubr.f32.mxu0 0.0
    %595 = vmatmul.mubr.f32.gmra.mrb[0].mxu0 %v499
    %v596 = vpop.f32.mrb[0].mxu0
    %v597 = vadd.f32 0.0, %v596
    %v598 = vpop.f32.mrb[0].mxu0
    %599 = vmatprep.mubr.f32.mxu0 0.0
    %600 = vmatmul.mubr.f32.gmra.mrb[0].mxu0 %v502
    %v601 = vpop.f32.mrb[0].mxu0
    %v602 = vadd.f32 0.0, %v601
    %v603 = vpop.f32.mrb[0].mxu0
    %604 = vmatprep.mubr.f32.mxu0 0.0
    %605 = vmatmul.mubr.f32.gmra.mrb[0].mxu0 %v505
    %v606 = vpop.f32.mrb[0].mxu0
    %v607 = vadd.f32 0.0, %v606
    %v608 = vpop.f32.mrb[0].mxu0
    %609 = vmatprep.mubr.f32.mxu0 0.0
    %610 = vmatmul.mubr.f32.gmra.mrb[0].mxu0 %v508
    %v611 = vpop.f32.mrb[0].mxu0
    %v612 = vadd.f32 0.0, %v611
    %v613 = vpop.f32.mrb[0].mxu0
    %614 = vdwg.mxu0
    %v616 = vcombine.high %v208, %v208
    %v618 = vunpack.c.l.s4 1966171168
    %v619 = vunpack.c.0.s8 %v618
    %v620 = vlaneseq
    %v621 = vshrl.u32 %v620, 7
    %v622 = vsub.s32 %v619, %v621
    %v623 = vrot.slane %v208, %v622
    %v625 = vunpack.c.l.s4 1966171168
    %v626 = vunpack.c.0.s8 %v625
    %v627 = vlaneseq
    %v628 = vshrl.u32 %v627, 7
    %v629 = vsub.s32 %v626, %v628
    %v630 = vrot.slane %v616, %v629
    %v631 = vcombine.high %v623, %v623
    %v632 = vcombine.high %v630, %v630
    %v634 = vunpack.c.l.s4 1966171168
    %v635 = vunpack.c.0.s8 %v634
    %v636 = vlaneseq
    %v637 = vshrl.u32 %v636, 7
    %v638 = vsub.s32 %v635, %v637
    %v639 = vrot.slane %v623, %v638
    %v641 = vunpack.c.l.s4 1966171168
    %v642 = vunpack.c.0.s8 %v641
    %v643 = vlaneseq
    %v644 = vshrl.u32 %v643, 7
    %v645 = vsub.s32 %v642, %v644
    %v646 = vrot.slane %v630, %v645
    %v648 = vunpack.c.l.s4 1966171168
    %v649 = vunpack.c.0.s8 %v648
    %v650 = vlaneseq
    %v651 = vshrl.u32 %v650, 7
    %v652 = vsub.s32 %v649, %v651
    %v653 = vrot.slane %v631, %v652
    %v655 = vunpack.c.l.s4 1966171168
    %v656 = vunpack.c.0.s8 %v655
    %v657 = vlaneseq
    %v658 = vshrl.u32 %v657, 7
    %v659 = vsub.s32 %v656, %v658
    %v660 = vrot.slane %v632, %v659
    %v661 = vcombine.high %v639, %v639
    %v662 = vcombine.high %v646, %v646
    %v663 = vcombine.high %v653, %v653
    %v664 = vcombine.high %v660, %v660
    %v665 = vlaneseq
    %v666 = vshrl.u32 %v665, 7
    %v667 = vsub.s32 0, %v666
    %v668 = vrot.slane %v639, %v667
    %v669 = vlaneseq
    %v670 = vshrl.u32 %v669, 7
    %v671 = vsub.s32 0, %v670
    %v672 = vrot.slane %v653, %v671
    %v673 = vlaneseq
    %v674 = vshrl.u32 %v673, 7
    %v675 = vsub.s32 0, %v674
    %v676 = vrot.slane %v661, %v675
    %v677 = vlaneseq
    %v678 = vshrl.u32 %v677, 7
    %v679 = vsub.s32 0, %v678
    %v680 = vrot.slane %v663, %v679
    %v681 = vlaneseq
    %v682 = vshrl.u32 %v681, 7
    %v683 = vsub.s32 0, %v682
    %v684 = vrot.slane %v646, %v683
    %v685 = vlaneseq
    %v686 = vshrl.u32 %v685, 7
    %v687 = vsub.s32 0, %v686
    %v688 = vrot.slane %v660, %v687
    %v689 = vlaneseq
    %v690 = vshrl.u32 %v689, 7
    %v691 = vsub.s32 0, %v690
    %v692 = vrot.slane %v662, %v691
    %v693 = vlaneseq
    %v694 = vshrl.u32 %v693, 7
    %v695 = vsub.s32 0, %v694
    %v696 = vrot.slane %v664, %v695
    %v705 = vmul.f32 %v577, %v668
    %v706 = vmul.f32 %v582, %v672
    %v707 = vmul.f32 %v587, %v676
    %v708 = vmul.f32 %v592, %v680
    %v709 = vmul.f32 %v597, %v684
    %v710 = vmul.f32 %v602, %v688
    %v711 = vmul.f32 %v607, %v692
    %v712 = vmul.f32 %v612, %v696
    %v713 = vld [vmem:[#allocation7] sm:$0xff]
    %v714 = vld [vmem:[#allocation7 + $0x8] sm:$0xff]
    %v715 = vld [vmem:[#allocation7 + $0x10] sm:$0xff]
    %v716 = vld [vmem:[#allocation7 + $0x18] sm:$0xff]
    %v717 = vld [vmem:[#allocation7 + $0x20] sm:$0xff]
    %v718 = vld [vmem:[#allocation7 + $0x28] sm:$0xff]
    %v719 = vld [vmem:[#allocation7 + $0x30] sm:$0xff]
    %v720 = vld [vmem:[#allocation7 + $0x38] sm:$0xff]
    %v722 = vsel %vm222, %v705, 0
    %v725 = vsel %vm222, %v706, 0
    %v728 = vsel %vm222, %v707, 0
    %v731 = vsel %vm222, %v708, 0
    %v734 = vsel %vm222, %v709, 0
    %v737 = vsel %vm222, %v710, 0
    %v740 = vsel %vm222, %v711, 0
    %v743 = vsel %vm222, %v712, 0
    %745 = vmatprep.subr.mxu0 0.0
    %746 = vmatpush1.msra.mxu0 %v713
    %747 = vmatprep.subr.mxu0 0.0
    %748 = vmatpush1.msra.mxu0 %v714
    %749 = vmatprep.subr.mxu0 0.0
    %750 = vmatpush1.msra.mxu0 %v715
    %751 = vmatprep.subr.mxu0 0.0
    %752 = vmatpush1.msra.mxu0 %v716
    %753 = vmatprep.subr.mxu0 0.0
    %754 = vmatpush1.msra.mxu0 %v717
    %755 = vmatprep.subr.mxu0 0.0
    %756 = vmatpush1.msra.mxu0 %v718
    %757 = vmatprep.subr.mxu0 0.0
    %758 = vmatpush1.msra.mxu0 %v719
    %759 = vmatprep.subr.mxu0 0.0
    %760 = vmatpush1.msra.mxu0 %v720
    %761 = vmatprep.subr.mxu0 0.0
    %762 = vmatpush1.msra.mxu0 0.0
    %763 = vmatprep.subr.mxu0 0.0
    %764 = vmatpush1.msra.mxu0 0.0
    %765 = vmatprep.subr.mxu0 0.0
    %766 = vmatpush1.msra.mxu0 0.0
    %767 = vmatprep.subr.mxu0 0.0
    %768 = vmatpush1.msra.mxu0 0.0
    %769 = vmatprep.subr.mxu0 0.0
    %770 = vmatpush1.msra.mxu0 0.0
    %771 = vmatprep.subr.mxu0 0.0
    %772 = vmatpush1.msra.mxu0 0.0
    %773 = vmatprep.subr.mxu0 0.0
    %774 = vmatpush1.msra.mxu0 0.0
    %775 = vmatprep.subr.mxu0 0.0
    %776 = vmatpush1.msra.mxu0 0.0
    %777 = vmatprep.subr.mxu0 0.0
    %778 = vmatpush1.msra.mxu0 0.0
    %779 = vmatprep.subr.mxu0 0.0
    %780 = vmatpush1.msra.mxu0 0.0
    %781 = vmatprep.subr.mxu0 0.0
    %782 = vmatpush1.msra.mxu0 0.0
    %783 = vmatprep.subr.mxu0 0.0
    %784 = vmatpush1.msra.mxu0 0.0
    %785 = vmatprep.subr.mxu0 0.0
    %786 = vmatpush1.msra.mxu0 0.0
    %787 = vmatprep.subr.mxu0 0.0
    %788 = vmatpush1.msra.mxu0 0.0
    %789 = vmatprep.subr.mxu0 0.0
    %790 = vmatpush1.msra.mxu0 0.0
    %791 = vmatprep.subr.mxu0 0.0
    %792 = vmatpush1.msra.mxu0 0.0
    %793 = vmatprep.subr.mxu0 0.0
    %794 = vmatpush1.msra.mxu0 0.0
    %795 = vmatprep.subr.mxu0 0.0
    %796 = vmatpush1.msra.mxu0 0.0
    %797 = vmatprep.subr.mxu0 0.0
    %798 = vmatpush1.msra.mxu0 0.0
    %799 = vmatprep.subr.mxu0 0.0
    %800 = vmatpush1.msra.mxu0 0.0
    %801 = vmatprep.subr.mxu0 0.0
    %802 = vmatpush1.msra.mxu0 0.0
    %803 = vmatprep.subr.mxu0 0.0
    %804 = vmatpush1.msra.mxu0 0.0
    %805 = vmatprep.subr.mxu0 0.0
    %806 = vmatpush1.msra.mxu0 0.0
    %807 = vmatprep.subr.mxu0 0.0
    %808 = vmatpush1.msra.mxu0 0.0
    %809 = vmatprep.mubr.f32.mxu0 0.0
    %810 = vmatmul.mubr.f32.gmra.mrb[0].mxu0 %v722
    %v811 = vpop.f32.mrb[0].mxu0
    %v812 = vadd.f32 0.0, %v811
    %v813 = vpop.f32.mrb[0].mxu0
    %814 = vmatprep.mubr.f32.mxu0 0.0
    %815 = vmatmul.mubr.f32.gmra.mrb[0].mxu0 %v725
    %v816 = vpop.f32.mrb[0].mxu0
    %v817 = vadd.f32 0.0, %v816
    %v818 = vpop.f32.mrb[0].mxu0
    %819 = vmatprep.mubr.f32.mxu0 0.0
    %820 = vmatmul.mubr.f32.gmra.mrb[0].mxu0 %v728
    %v821 = vpop.f32.mrb[0].mxu0
    %v822 = vadd.f32 0.0, %v821
    %v823 = vpop.f32.mrb[0].mxu0
    %824 = vmatprep.mubr.f32.mxu0 0.0
    %825 = vmatmul.mubr.f32.gmra.mrb[0].mxu0 %v731
    %v826 = vpop.f32.mrb[0].mxu0
    %v827 = vadd.f32 0.0, %v826
    %v828 = vpop.f32.mrb[0].mxu0
    %829 = vmatprep.mubr.f32.mxu0 0.0
    %830 = vmatmul.mubr.f32.gmra.mrb[0].mxu0 %v734
    %v831 = vpop.f32.mrb[0].mxu0
    %v832 = vadd.f32 0.0, %v831
    %v833 = vpop.f32.mrb[0].mxu0
    %834 = vmatprep.mubr.f32.mxu0 0.0
    %835 = vmatmul.mubr.f32.gmra.mrb[0].mxu0 %v737
    %v836 = vpop.f32.mrb[0].mxu0
    %v837 = vadd.f32 0.0, %v836
    %v838 = vpop.f32.mrb[0].mxu0
    %839 = vmatprep.mubr.f32.mxu0 0.0
    %840 = vmatmul.mubr.f32.gmra.mrb[0].mxu0 %v740
    %v841 = vpop.f32.mrb[0].mxu0
    %v842 = vadd.f32 0.0, %v841
    %v843 = vpop.f32.mrb[0].mxu0
    %844 = vmatprep.mubr.f32.mxu0 0.0
    %845 = vmatmul.mubr.f32.gmra.mrb[0].mxu0 %v743
    %v846 = vpop.f32.mrb[0].mxu0
    %v847 = vadd.f32 0.0, %v846
    %v848 = vpop.f32.mrb[0].mxu0
    %849 = vdwg.mxu0
    %v850 = vmul.f32 %v812, %v812
    %v851 = vmul.f32 %v817, %v817
    %v852 = vmul.f32 %v822, %v822
    %v853 = vmul.f32 %v827, %v827
    %v854 = vmul.f32 %v832, %v832
    %v855 = vmul.f32 %v837, %v837
    %v856 = vmul.f32 %v842, %v842
    %v857 = vmul.f32 %v847, %v847
    %v858 = vsel %vm131, %v850, 0.0
    %859 = vadd.xlane.f32.xlu0 %v858
    %v860 = vpop.xlane.xlu0 %859
    %v861 = vsel %vm131, %v851, 0.0
    %862 = vadd.xlane.f32.xlu0 %v861
    %v863 = vpop.xlane.xlu0 %862
    %v864 = vsel %vm131, %v852, 0.0
    %865 = vadd.xlane.f32.xlu0 %v864
    %v866 = vpop.xlane.xlu0 %865
    %v867 = vsel %vm131, %v853, 0.0
    %868 = vadd.xlane.f32.xlu0 %v867
    %v869 = vpop.xlane.xlu0 %868
    %v870 = vsel %vm131, %v854, 0.0
    %871 = vadd.xlane.f32.xlu0 %v870
    %v872 = vpop.xlane.xlu0 %871
    %v873 = vsel %vm131, %v855, 0.0
    %874 = vadd.xlane.f32.xlu0 %v873
    %v875 = vpop.xlane.xlu0 %874
    %v876 = vsel %vm131, %v856, 0.0
    %877 = vadd.xlane.f32.xlu0 %v876
    %v878 = vpop.xlane.xlu0 %877
    %v879 = vsel %vm131, %v857, 0.0
    %880 = vadd.xlane.f32.xlu0 %v879
    %v881 = vpop.xlane.xlu0 %880
    %v890 = vlaneseq
    %v891 = vand.u32 %v890, 127
    %v892 = vlaneseq
    %v893 = vshrl.u32 %v892, 7
    %v894 = vsub.s32 %v891, %v893
    %v895 = vrot.slane %v860, %v894
    %v896 = vlaneseq
    %v897 = vshrl.u32 %v896, 7
    %v898 = vsub.s32 %v891, %v897
    %v899 = vrot.slane %v863, %v898
    %v900 = vlaneseq
    %v901 = vshrl.u32 %v900, 7
    %v902 = vsub.s32 %v891, %v901
    %v903 = vrot.slane %v866, %v902
    %v904 = vlaneseq
    %v905 = vshrl.u32 %v904, 7
    %v906 = vsub.s32 %v891, %v905
    %v907 = vrot.slane %v869, %v906
    %v908 = vlaneseq
    %v909 = vshrl.u32 %v908, 7
    %v910 = vsub.s32 %v891, %v909
    %v911 = vrot.slane %v872, %v910
    %v912 = vlaneseq
    %v913 = vshrl.u32 %v912, 7
    %v914 = vsub.s32 %v891, %v913
    %v915 = vrot.slane %v875, %v914
    %v916 = vlaneseq
    %v917 = vshrl.u32 %v916, 7
    %v918 = vsub.s32 %v891, %v917
    %v919 = vrot.slane %v878, %v918
    %v920 = vlaneseq
    %v921 = vshrl.u32 %v920, 7
    %v922 = vsub.s32 %v891, %v921
    %v923 = vrot.slane %v881, %v922
    %vm924 = vcmask 1041409
    %v925 = vsel %vm924, %v899, %v895
    %vm926 = vcmask 1042434
    %v927 = vsel %vm926, %v903, %v925
    %vm928 = vcmask 1043459
    %v929 = vsel %vm928, %v907, %v927
    %vm930 = vcmask 1044484
    %v931 = vsel %vm930, %v911, %v929
    %vm932 = vcmask 1045509
    %v933 = vsel %vm932, %v915, %v931
    %vm934 = vcmask 1046534
    %v935 = vsel %vm934, %v919, %v933
    %vm936 = vcmask 1047559
    %v937 = vsel %vm936, %v923, %v935
    %vm939 = vcmask 64512
    %v940 = vsel %vm939, %v937, 0.0
    %941 = vadd.xlane.f32.xlu0 %v940
    %v942 = vpop.xlane.xlu0 %941
    %v943 = vrsqrt.pop %v942
    %v944 = vmul.f32 %v942, %v943
    %vm945 = vcmp.eq.f32.partialorder %v942, inf
    %v946 = vsel %vm945, %v942, %v944
    %vm947 = vcmp.eq.f32.partialorder %v942, 0.0
    %v948 = vand.u32 %v942, 2147483648
    %v949 = vsel %vm947, %v948, %v946
    %v950 = vtanh.pop %v202
    %v951 = vld [vmem:[#allocation6] sm:$0xff]
    %v952 = vld [vmem:[#allocation6 + $0x8] sm:$0xff]
    %v953 = vld [vmem:[#allocation6 + $0x10] sm:$0xff]
    %v954 = vld [vmem:[#allocation6 + $0x18] sm:$0xff]
    %v955 = vld [vmem:[#allocation6 + $0x20] sm:$0xff]
    %v956 = vld [vmem:[#allocation6 + $0x28] sm:$0xff]
    %v957 = vld [vmem:[#allocation6 + $0x30] sm:$0xff]
    %v958 = vld [vmem:[#allocation6 + $0x38] sm:$0xff]
    %v959 = vld [vmem:[#allocation12 + $0x3] sm:$0x1]
    %v960 = vlaneseq
    %v961 = vshrl.u32 %v960, 7
    %v962 = vsub.s32 0, %v961
    %v963 = vrot.slane %v959, %v962
    %965 = vrot.lane.b32.xlu0 %v950, 64
    %v966 = vpop.permute.xlu0 %965
    %v967 = vsel %vm222, %v966, 0
    %969 = vmatprep.subr.mxu0 0.0
    %970 = vmatpush1.msra.mxu0 %v951
    %971 = vmatprep.subr.mxu0 0.0
    %972 = vmatpush1.msra.mxu0 %v952
    %973 = vmatprep.subr.mxu0 0.0
    %974 = vmatpush1.msra.mxu0 %v953
    %975 = vmatprep.subr.mxu0 0.0
    %976 = vmatpush1.msra.mxu0 %v954
    %977 = vmatprep.subr.mxu0 0.0
    %978 = vmatpush1.msra.mxu0 %v955
    %979 = vmatprep.subr.mxu0 0.0
    %980 = vmatpush1.msra.mxu0 %v956
    %981 = vmatprep.subr.mxu0 0.0
    %982 = vmatpush1.msra.mxu0 %v957
    %983 = vmatprep.subr.mxu0 0.0
    %984 = vmatpush1.msra.mxu0 %v958
    %985 = vmatprep.subr.mxu0 0.0
    %986 = vmatpush1.msra.mxu0 0.0
    %987 = vmatprep.subr.mxu0 0.0
    %988 = vmatpush1.msra.mxu0 0.0
    %989 = vmatprep.subr.mxu0 0.0
    %990 = vmatpush1.msra.mxu0 0.0
    %991 = vmatprep.subr.mxu0 0.0
    %992 = vmatpush1.msra.mxu0 0.0
    %993 = vmatprep.subr.mxu0 0.0
    %994 = vmatpush1.msra.mxu0 0.0
    %995 = vmatprep.subr.mxu0 0.0
    %996 = vmatpush1.msra.mxu0 0.0
    %997 = vmatprep.subr.mxu0 0.0
    %998 = vmatpush1.msra.mxu0 0.0
    %999 = vmatprep.subr.mxu0 0.0
    %1000 = vmatpush1.msra.mxu0 0.0
    %1001 = vmatprep.subr.mxu0 0.0
    %1002 = vmatpush1.msra.mxu0 0.0
    %1003 = vmatprep.subr.mxu0 0.0
    %1004 = vmatpush1.msra.mxu0 0.0
    %1005 = vmatprep.subr.mxu0 0.0
    %1006 = vmatpush1.msra.mxu0 0.0
    %1007 = vmatprep.subr.mxu0 0.0
    %1008 = vmatpush1.msra.mxu0 0.0
    %1009 = vmatprep.subr.mxu0 0.0
    %1010 = vmatpush1.msra.mxu0 0.0
    %1011 = vmatprep.subr.mxu0 0.0
    %1012 = vmatpush1.msra.mxu0 0.0
    %1013 = vmatprep.subr.mxu0 0.0
    %1014 = vmatpush1.msra.mxu0 0.0
    %1015 = vmatprep.subr.mxu0 0.0
    %1016 = vmatpush1.msra.mxu0 0.0
    %1017 = vmatprep.subr.mxu0 0.0
    %1018 = vmatpush1.msra.mxu0 0.0
    %1019 = vmatprep.subr.mxu0 0.0
    %1020 = vmatpush1.msra.mxu0 0.0
    %1021 = vmatprep.subr.mxu0 0.0
    %1022 = vmatpush1.msra.mxu0 0.0
    %1023 = vmatprep.subr.mxu0 0.0
    %1024 = vmatpush1.msra.mxu0 0.0
    %1025 = vmatprep.subr.mxu0 0.0
    %1026 = vmatpush1.msra.mxu0 0.0
    %1027 = vmatprep.subr.mxu0 0.0
    %1028 = vmatpush1.msra.mxu0 0.0
    %1029 = vmatprep.subr.mxu0 0.0
    %1030 = vmatpush1.msra.mxu0 0.0
    %1031 = vmatprep.subr.mxu0 0.0
    %1032 = vmatpush1.msra.mxu0 0.0
    %1033 = vmatprep.mubr.f32.mxu0 0.0
    %1034 = vmatmul.mubr.f32.gmra.mrb[0].mxu0 %v967
    %v1035 = vpop.f32.mrb[0].mxu0
    %v1036 = vadd.f32 %v963, %v1035
    %v1037 = vpop.f32.mrb[0].mxu0
    %1038 = vdwg.mxu0
    %v1039 = vtanh.pop %v1036
    %v1040 = vld [vmem:[#allocation12 + $0x5] sm:$0x1]
    %v1041 = vlaneseq
    %v1042 = vshrl.u32 %v1041, 7
    %v1043 = vsub.s32 0, %v1042
    %v1044 = vrot.slane %v1040, %v1043
    %v1045 = vmul.f32 %v1039, %v1044
    %v1046 = vsel %vm309, %v1045, 0.0
    %1047 = vadd.xlane.f32.xlu0 %v1046
    %v1048 = vpop.xlane.xlu0 %1047
    %v1049 = vld [vmem:[#allocation12 + $0x4] sm:$0x1]
    %v1050 = vlaneseq
    %v1051 = vshrl.u32 %v1050, 7
    %v1052 = vsub.s32 0, %v1051
    %v1053 = vrot.slane %v1049, %v1052
    %v1054 = vadd.f32 %v1048, %v1053
    %v1055 = vmin.f32 %v1054, 20.0
    %vm1056 = vcmp.gt.f32.partialorder %v1054, 20.0
    %v1057 = vmul.f32 %v1055, 1.442695
    %v1058 = vpow.pop %v1057
    %v1059 = vadd.f32 %v1058, 1.0
    %v1060 = vlog2.pop %v1059
    %v1061 = vmul.f32 %v1060, 0.6931472
    %v1062 = vmul.f32 -0.5, %v1058
    %v1063 = vadd.f32 %v1062, 1.0
    %v1064 = vmul.f32 %v1063, %v1058
    %v1065 = vand.u32 2147483647, %v1058
    %vm1066 = vcmp.lt.f32.partialorder %v1065, 0.0004427343
    %v1067 = vsel %vm1066, %v1064, %v1061
    %v1068 = vsel %vm1056, %v1054, %v1067
    %v1069 = vadd.f32 %v949, 0.0001
    %v1070 = vrcp.pop %v1069
    %v1071 = vmul.f32 %v1068, %v1070
    %1073 = vset.pattern.permute.xlu0 0
    %1074 = vperm.xlu0 %1073, %v1071
    %v1075 = vpop.permute.xlu0 %1074
    %v1077 = vmul.f32 %v380, %v1075
    %vm1078 = vcmp.eq.s32.totalorder %v891, 8
    %1080 = vset.pattern.permute.xlu0 0
    %1081 = vperm.xlu0 %1080, %v1068
    %v1082 = vpop.permute.xlu0 %1081
    %v1084 = vsel %vm1078, %v1082, %v1077
    %vm1085 = vcmp.eq.s32.totalorder %v891, 9
    %v1086 = vsel %vm1085, %v949, %v1084
    %1087 = vst [vmem:[%s9] sm:$0xff] %v1086
    // Predicated region
    $region66: #{_lambda_.1} parent=1 // pred_check
      _
    $region67: #{_lambda_.1} parent=1 // pred_check_branch
      %1089 = sbr.rel (0) target = $region69
    $region68: #{_lambda_.1} parent=1 // pred_region
      _
    $region69: #{_lambda_.1} parent=1 // pred_fallthru
      _
    // Predicated region
    $region70: #{_lambda_.1} parent=1 // pred_check
      _
    $region71: #{_lambda_.1} parent=1 // pred_check_branch
      %1091 = sbr.rel (0) target = $region73
    $region72: #{_lambda_.1} parent=1 // pred_region
      _
    $region73: #{_lambda_.1} parent=1 // pred_fallthru
      _
    %1092 = vsyncpa [#allocation3], 1
    %1093 = vsyncpa [#allocation5], 1
    %1094 = vsyncpa [#allocation8], 1
    %1095 = vsyncpa [#allocation11], 1

</llo_original>
